<compile_context>
chip_gen: v5e
topology: v5e:2x2
jax: 0.10.0
libtpu: 0.0.40
codegen_flags: <defaults>
</compile_context>

<pallas_src>
import jax
import jax.numpy as jnp
from jax import lax
from jax.experimental import pallas as pl
from jax.experimental.pallas import tpu as pltpu

# Model dims implied by the module (char_set = list('hello'))
INPUT_SIZE = 5     # len(char_set)
HIDDEN_SIZE = 8
OUTPUT_SIZE = 5    # len(char_set)


def rnn_kernel(x_ref, h0_ref, wih_t_ref, whh_t_ref, b_ref, wrc_t_ref, brc_ref,
               out_ref, hn_ref, pre_scratch):
    """Whole forward pass in one invocation; serial recurrence via fori_loop."""
    T, B, I = x_ref.shape
    H = whh_t_ref.shape[0]
    O = wrc_t_ref.shape[1]

    # (1) Batched input projection for ALL timesteps (off the serial path):
    #     pre[t] = x_t @ W_ih^T + (b_ih + b_hh)
    x_all = x_ref[...].reshape(T * B, I)
    pre = jnp.dot(x_all, wih_t_ref[...],
                  preferred_element_type=jnp.float32) + b_ref[...]
    pre_scratch[...] = pre.reshape(T, B, H)

    whh_t = whh_t_ref[...]            # (H, H), loaded once

    # (2) Serial recurrence: one matmul + tanh per step.  Hidden state lives in
    #     the loop carry; h_t overwrites pre_scratch[t] in place.
    def step(t, h):
        h_new = jnp.tanh(pre_scratch[t]
                         + jnp.dot(h, whh_t, preferred_element_type=jnp.float32))
        pre_scratch[t] = h_new
        return h_new

    h_last = lax.fori_loop(0, T, step, h0_ref[...], unroll=True)
    hn_ref[...] = h_last.astype(hn_ref.dtype)

    # (3) Batched output projection over the full hidden history (lane-dense,
    #     single matmul + single store instead of T narrow masked stores).
    hs = pre_scratch[...].reshape(T * B, H)
    out = jnp.dot(hs, wrc_t_ref[...],
                  preferred_element_type=jnp.float32) + brc_ref[...]
    out_ref[...] = out.reshape(T, B, O).astype(out_ref.dtype)


def rnn_forward(x, hidden, params):
    """x: (B, T, I) f32, hidden: (1, B, H) f32 or None -> (out (B,T,O), hidden (1,B,H))."""
    B, T, I = x.shape
    H = params["w_hh"].shape[0]
    O = params["w_rc"].shape[0]
    if hidden is None:
        hidden = jnp.zeros((1, B, H), jnp.float32)

    # Wrapper-side layout plumbing (free): time-major x, pre-transposed weights,
    # pre-summed RNN biases.
    x_tm = jnp.transpose(x, (1, 0, 2))            # (T, B, I)
    h0 = hidden[0]                                # (B, H)
    wih_t = jnp.transpose(params["w_ih"])         # (I, H)
    whh_t = jnp.transpose(params["w_hh"])         # (H, H)
    wrc_t = jnp.transpose(params["w_rc"])         # (H, O)
    b_sum = params["b_ih"] + params["b_hh"]       # (1, H)
    brc = params["b_rc"]                          # (1, O)

    def full(shape):
        # whole-array block, independent of the (size-1) grid index
        return pl.BlockSpec(shape, lambda i, _n=len(shape): (0,) * _n)

    out_tm, h_n = pl.pallas_call(
        rnn_kernel,
        out_shape=(jax.ShapeDtypeStruct((T, B, O), jnp.float32),
                   jax.ShapeDtypeStruct((B, H), jnp.float32)),
        grid_spec=pltpu.PrefetchScalarGridSpec(
            num_scalar_prefetch=0,
            grid=(1,),                             # single invocation; loop is internal
            in_specs=[
                full((T, B, I)),    # x (time-major, fully resident)
                full((B, H)),       # h0
                full((I, H)),       # W_ih^T
                full((H, H)),       # W_hh^T
                full((1, H)),       # b_ih + b_hh
                full((H, O)),       # W_rc^T
                full((1, O)),       # b_rc
            ],
            out_specs=(
                full((T, B, O)),    # out (time-major)
                full((B, H)),       # final hidden
            ),
            scratch_shapes=[pltpu.VMEM((T, B, H), jnp.float32)],  # xproj / h history
        ),
        compiler_params=pltpu.CompilerParams(
            dimension_semantics=("arbitrary",)),
    )(x_tm, h0, wih_t, whh_t, b_sum, wrc_t, brc)

    out = jnp.transpose(out_tm, (1, 0, 2))        # back to (B, T, O), batch_first
    return out, h_n[None]                         # hidden shape (1, B, H)


def rnn_reference(x, hidden, p):
    """Pure-JAX reference of the same forward pass (for correctness check)."""
    def step(h, x_t):
        h_new = jnp.tanh(x_t @ p["w_ih"].T + p["b_ih"][0]
                         + h @ p["w_hh"].T + p["b_hh"][0])
        return h_new, h_new
    h_last, hs = lax.scan(step, hidden[0], jnp.transpose(x, (1, 0, 2)))
    out = hs @ p["w_rc"].T + p["b_rc"][0]
    return jnp.transpose(out, (1, 0, 2)), h_last[None]


if __name__ == "__main__":
    key = jax.random.PRNGKey(0)
    kx, k0, k1, k2, k3, k4, k5 = jax.random.split(key, 7)

    B, T = 2, 6
    bound = float(1.0 / (HIDDEN_SIZE ** 0.5))   # PyTorch default init range

    def u(k, shape):
        return jax.random.uniform(k, shape, jnp.float32, -bound, bound)

    params = {
        "w_ih": u(k0, (HIDDEN_SIZE, INPUT_SIZE)),
        "w_hh": u(k1, (HIDDEN_SIZE, HIDDEN_SIZE)),
        "b_ih": u(k2, (1, HIDDEN_SIZE)),
        "b_hh": u(k3, (1, HIDDEN_SIZE)),
        "w_rc": u(k4, (OUTPUT_SIZE, HIDDEN_SIZE)),
        "b_rc": u(k5, (1, OUTPUT_SIZE)),
    }

    x = jax.random.normal(kx, (B, T, INPUT_SIZE), jnp.float32)
    hidden = jnp.zeros((1, B, HIDDEN_SIZE), jnp.float32)

    out, h_n = rnn_forward(x, hidden, params)
    jax.block_until_ready((out, h_n))

    ref_out, ref_h = rnn_reference(x, hidden, params)
    assert out.shape == (B, T, OUTPUT_SIZE) and h_n.shape == (1, B, HIDDEN_SIZE)
    assert jnp.allclose(out, ref_out, atol=1e-5), "output mismatch vs reference"
    assert jnp.allclose(h_n, ref_h, atol=1e-5), "hidden mismatch vs reference"

    print("KERNEL_OK")
</pallas_src>

<mosaic_0001>
module attributes {stable_mosaic.version = 11 : i64} {
  func.func @rnn_kernel(%arg0: i32, %arg1: memref<6x2x5xf32, #tpu.memory_space<vmem>>, %arg2: memref<2x8xf32, #tpu.memory_space<vmem>>, %arg3: memref<5x8xf32, #tpu.memory_space<vmem>>, %arg4: memref<8x8xf32, #tpu.memory_space<vmem>>, %arg5: memref<1x8xf32, #tpu.memory_space<vmem>>, %arg6: memref<8x5xf32, #tpu.memory_space<vmem>>, %arg7: memref<1x5xf32, #tpu.memory_space<vmem>>, %arg8: memref<6x2x5xf32, #tpu.memory_space<vmem>>, %arg9: memref<2x8xf32, #tpu.memory_space<vmem>>, %arg10: memref<6x2x8xf32, #tpu.memory_space<vmem>>) attributes {dimension_semantics = [#tpu.dimension_semantics<arbitrary>], iteration_bounds = array<i64: 1>, scalar_prefetch = 0 : i64, scratch_operands = 1 : i64, tpu.core_type = #tpu.core_type<tc>, window_params = [{pipeline_mode = #tpu.pipeline_mode<synchronous>, transform_indices = @transform_0, window_bounds = array<i64: 6, 2, 5>}, {pipeline_mode = #tpu.pipeline_mode<synchronous>, transform_indices = @transform_1, window_bounds = array<i64: 2, 8>}, {pipeline_mode = #tpu.pipeline_mode<synchronous>, transform_indices = @transform_2, window_bounds = array<i64: 5, 8>}, {pipeline_mode = #tpu.pipeline_mode<synchronous>, transform_indices = @transform_3, window_bounds = array<i64: 8, 8>}, {pipeline_mode = #tpu.pipeline_mode<synchronous>, transform_indices = @transform_4, window_bounds = array<i64: 1, 8>}, {pipeline_mode = #tpu.pipeline_mode<synchronous>, transform_indices = @transform_5, window_bounds = array<i64: 8, 5>}, {pipeline_mode = #tpu.pipeline_mode<synchronous>, transform_indices = @transform_6, window_bounds = array<i64: 1, 5>}, {pipeline_mode = #tpu.pipeline_mode<synchronous>, transform_indices = @transform_7, window_bounds = array<i64: 6, 2, 5>}, {pipeline_mode = #tpu.pipeline_mode<synchronous>, transform_indices = @transform_8, window_bounds = array<i64: 2, 8>}]} {
    %c0 = arith.constant 0 : index
    %c0_0 = arith.constant 0 : index
    %c0_1 = arith.constant 0 : index
    %0 = vector.load %arg1[%c0, %c0_0, %c0_1] : memref<6x2x5xf32, #tpu.memory_space<vmem>>, vector<6x2x5xf32>
    %1 = vector.shape_cast %0 : vector<6x2x5xf32> to vector<12x5xf32>
    %c0_2 = arith.constant 0 : index
    %c0_3 = arith.constant 0 : index
    %2 = vector.load %arg3[%c0_2, %c0_3] : memref<5x8xf32, #tpu.memory_space<vmem>>, vector<5x8xf32>
    %cst = arith.constant dense<0.000000e+00> : vector<12x8xf32>
    %3 = tpu.matmul %1, %2, %cst {dimension_numbers = #tpu.dot_dimension_numbers<[1], [0], [0], [1], [0, 0, 1, 1], [], []>} : vector<12x5xf32>, vector<5x8xf32>, vector<12x8xf32> -> vector<12x8xf32>
    %c0_4 = arith.constant 0 : index
    %c0_5 = arith.constant 0 : index
    %4 = vector.load %arg5[%c0_4, %c0_5] : memref<1x8xf32, #tpu.memory_space<vmem>>, vector<1x8xf32>
    %5 = vector.broadcast %4 : vector<1x8xf32> to vector<12x8xf32>
    %6 = arith.addf %3, %5 : vector<12x8xf32>
    %7 = vector.shape_cast %6 : vector<12x8xf32> to vector<6x2x8xf32>
    %c0_6 = arith.constant 0 : index
    %c0_7 = arith.constant 0 : index
    %c0_8 = arith.constant 0 : index
    %8 = vector.load %arg10[%c0_6, %c0_7, %c0_8] : memref<6x2x8xf32, #tpu.memory_space<vmem>>, vector<6x2x8xf32>
    tpu.vector_store %arg10[%c0_6, %c0_7, %c0_8], %7 {strides = array<i32>} : memref<6x2x8xf32, #tpu.memory_space<vmem>>, vector<6x2x8xf32>,
    %c0_9 = arith.constant 0 : index
    %c0_10 = arith.constant 0 : index
    %9 = vector.load %arg4[%c0_9, %c0_10] : memref<8x8xf32, #tpu.memory_space<vmem>>, vector<8x8xf32>
    %c0_11 = arith.constant 0 : index
    %c0_12 = arith.constant 0 : index
    %10 = vector.load %arg2[%c0_11, %c0_12] : memref<2x8xf32, #tpu.memory_space<vmem>>, vector<2x8xf32>
    %c0_i32 = arith.constant 0 : i32
    %11 = arith.index_cast %c0_i32 : i32 to index
    %c0_13 = arith.constant 0 : index
    %c0_14 = arith.constant 0 : index
    %12 = vector.load %arg10[%11, %c0_13, %c0_14] : memref<6x2x8xf32, #tpu.memory_space<vmem>>, vector<1x2x8xf32>
    %13 = vector.shape_cast %12 : vector<1x2x8xf32> to vector<2x8xf32>
    %cst_15 = arith.constant dense<0.000000e+00> : vector<2x8xf32>
    %14 = tpu.matmul %10, %9, %cst_15 {dimension_numbers = #tpu.dot_dimension_numbers<[1], [0], [0], [1], [0, 0, 1, 1], [], []>} : vector<2x8xf32>, vector<8x8xf32>, vector<2x8xf32> -> vector<2x8xf32>
    %15 = arith.addf %13, %14 : vector<2x8xf32>
    %16 = math.tanh %15 : vector<2x8xf32>
    %17 = arith.index_cast %c0_i32 : i32 to index
    %c0_16 = arith.constant 0 : index
    %c0_17 = arith.constant 0 : index
    %18 = vector.load %arg10[%17, %c0_16, %c0_17] : memref<6x2x8xf32, #tpu.memory_space<vmem>>, vector<1x2x8xf32>
    %19 = vector.shape_cast %18 : vector<1x2x8xf32> to vector<2x8xf32>
    %20 = vector.shape_cast %16 : vector<2x8xf32> to vector<1x2x8xf32>
    tpu.vector_store %arg10[%17, %c0_16, %c0_17], %20 {strides = array<i32>} : memref<6x2x8xf32, #tpu.memory_space<vmem>>, vector<1x2x8xf32>,
    %c1_i32 = arith.constant 1 : i32
    %21 = arith.index_cast %c1_i32 : i32 to index
    %c0_18 = arith.constant 0 : index
    %c0_19 = arith.constant 0 : index
    %22 = vector.load %arg10[%21, %c0_18, %c0_19] : memref<6x2x8xf32, #tpu.memory_space<vmem>>, vector<1x2x8xf32>
    %23 = vector.shape_cast %22 : vector<1x2x8xf32> to vector<2x8xf32>
    %cst_20 = arith.constant dense<0.000000e+00> : vector<2x8xf32>
    %24 = tpu.matmul %16, %9, %cst_20 {dimension_numbers = #tpu.dot_dimension_numbers<[1], [0], [0], [1], [0, 0, 1, 1], [], []>} : vector<2x8xf32>, vector<8x8xf32>, vector<2x8xf32> -> vector<2x8xf32>
    %25 = arith.addf %23, %24 : vector<2x8xf32>
    %26 = math.tanh %25 : vector<2x8xf32>
    %27 = arith.index_cast %c1_i32 : i32 to index
    %c0_21 = arith.constant 0 : index
    %c0_22 = arith.constant 0 : index
    %28 = vector.load %arg10[%27, %c0_21, %c0_22] : memref<6x2x8xf32, #tpu.memory_space<vmem>>, vector<1x2x8xf32>
    %29 = vector.shape_cast %28 : vector<1x2x8xf32> to vector<2x8xf32>
    %30 = vector.shape_cast %26 : vector<2x8xf32> to vector<1x2x8xf32>
    tpu.vector_store %arg10[%27, %c0_21, %c0_22], %30 {strides = array<i32>} : memref<6x2x8xf32, #tpu.memory_space<vmem>>, vector<1x2x8xf32>,
    %c2_i32 = arith.constant 2 : i32
    %31 = arith.index_cast %c2_i32 : i32 to index
    %c0_23 = arith.constant 0 : index
    %c0_24 = arith.constant 0 : index
    %32 = vector.load %arg10[%31, %c0_23, %c0_24] : memref<6x2x8xf32, #tpu.memory_space<vmem>>, vector<1x2x8xf32>
    %33 = vector.shape_cast %32 : vector<1x2x8xf32> to vector<2x8xf32>
    %cst_25 = arith.constant dense<0.000000e+00> : vector<2x8xf32>
    %34 = tpu.matmul %26, %9, %cst_25 {dimension_numbers = #tpu.dot_dimension_numbers<[1], [0], [0], [1], [0, 0, 1, 1], [], []>} : vector<2x8xf32>, vector<8x8xf32>, vector<2x8xf32> -> vector<2x8xf32>
    %35 = arith.addf %33, %34 : vector<2x8xf32>
    %36 = math.tanh %35 : vector<2x8xf32>
    %37 = arith.index_cast %c2_i32 : i32 to index
    %c0_26 = arith.constant 0 : index
    %c0_27 = arith.constant 0 : index
    %38 = vector.load %arg10[%37, %c0_26, %c0_27] : memref<6x2x8xf32, #tpu.memory_space<vmem>>, vector<1x2x8xf32>
    %39 = vector.shape_cast %38 : vector<1x2x8xf32> to vector<2x8xf32>
    %40 = vector.shape_cast %36 : vector<2x8xf32> to vector<1x2x8xf32>
    tpu.vector_store %arg10[%37, %c0_26, %c0_27], %40 {strides = array<i32>} : memref<6x2x8xf32, #tpu.memory_space<vmem>>, vector<1x2x8xf32>,
    %c3_i32 = arith.constant 3 : i32
    %41 = arith.index_cast %c3_i32 : i32 to index
    %c0_28 = arith.constant 0 : index
    %c0_29 = arith.constant 0 : index
    %42 = vector.load %arg10[%41, %c0_28, %c0_29] : memref<6x2x8xf32, #tpu.memory_space<vmem>>, vector<1x2x8xf32>
    %43 = vector.shape_cast %42 : vector<1x2x8xf32> to vector<2x8xf32>
    %cst_30 = arith.constant dense<0.000000e+00> : vector<2x8xf32>
    %44 = tpu.matmul %36, %9, %cst_30 {dimension_numbers = #tpu.dot_dimension_numbers<[1], [0], [0], [1], [0, 0, 1, 1], [], []>} : vector<2x8xf32>, vector<8x8xf32>, vector<2x8xf32> -> vector<2x8xf32>
    %45 = arith.addf %43, %44 : vector<2x8xf32>
    %46 = math.tanh %45 : vector<2x8xf32>
    %47 = arith.index_cast %c3_i32 : i32 to index
    %c0_31 = arith.constant 0 : index
    %c0_32 = arith.constant 0 : index
    %48 = vector.load %arg10[%47, %c0_31, %c0_32] : memref<6x2x8xf32, #tpu.memory_space<vmem>>, vector<1x2x8xf32>
    %49 = vector.shape_cast %48 : vector<1x2x8xf32> to vector<2x8xf32>
    %50 = vector.shape_cast %46 : vector<2x8xf32> to vector<1x2x8xf32>
    tpu.vector_store %arg10[%47, %c0_31, %c0_32], %50 {strides = array<i32>} : memref<6x2x8xf32, #tpu.memory_space<vmem>>, vector<1x2x8xf32>,
    %c4_i32 = arith.constant 4 : i32
    %51 = arith.index_cast %c4_i32 : i32 to index
    %c0_33 = arith.constant 0 : index
    %c0_34 = arith.constant 0 : index
    %52 = vector.load %arg10[%51, %c0_33, %c0_34] : memref<6x2x8xf32, #tpu.memory_space<vmem>>, vector<1x2x8xf32>
    %53 = vector.shape_cast %52 : vector<1x2x8xf32> to vector<2x8xf32>
    %cst_35 = arith.constant dense<0.000000e+00> : vector<2x8xf32>
    %54 = tpu.matmul %46, %9, %cst_35 {dimension_numbers = #tpu.dot_dimension_numbers<[1], [0], [0], [1], [0, 0, 1, 1], [], []>} : vector<2x8xf32>, vector<8x8xf32>, vector<2x8xf32> -> vector<2x8xf32>
    %55 = arith.addf %53, %54 : vector<2x8xf32>
    %56 = math.tanh %55 : vector<2x8xf32>
    %57 = arith.index_cast %c4_i32 : i32 to index
    %c0_36 = arith.constant 0 : index
    %c0_37 = arith.constant 0 : index
    %58 = vector.load %arg10[%57, %c0_36, %c0_37] : memref<6x2x8xf32, #tpu.memory_space<vmem>>, vector<1x2x8xf32>
    %59 = vector.shape_cast %58 : vector<1x2x8xf32> to vector<2x8xf32>
    %60 = vector.shape_cast %56 : vector<2x8xf32> to vector<1x2x8xf32>
    tpu.vector_store %arg10[%57, %c0_36, %c0_37], %60 {strides = array<i32>} : memref<6x2x8xf32, #tpu.memory_space<vmem>>, vector<1x2x8xf32>,
    %c5_i32 = arith.constant 5 : i32
    %61 = arith.index_cast %c5_i32 : i32 to index
    %c0_38 = arith.constant 0 : index
    %c0_39 = arith.constant 0 : index
    %62 = vector.load %arg10[%61, %c0_38, %c0_39] : memref<6x2x8xf32, #tpu.memory_space<vmem>>, vector<1x2x8xf32>
    %63 = vector.shape_cast %62 : vector<1x2x8xf32> to vector<2x8xf32>
    %cst_40 = arith.constant dense<0.000000e+00> : vector<2x8xf32>
    %64 = tpu.matmul %56, %9, %cst_40 {dimension_numbers = #tpu.dot_dimension_numbers<[1], [0], [0], [1], [0, 0, 1, 1], [], []>} : vector<2x8xf32>, vector<8x8xf32>, vector<2x8xf32> -> vector<2x8xf32>
    %65 = arith.addf %63, %64 : vector<2x8xf32>
    %66 = math.tanh %65 : vector<2x8xf32>
    %67 = arith.index_cast %c5_i32 : i32 to index
    %c0_41 = arith.constant 0 : index
    %c0_42 = arith.constant 0 : index
    %68 = vector.load %arg10[%67, %c0_41, %c0_42] : memref<6x2x8xf32, #tpu.memory_space<vmem>>, vector<1x2x8xf32>
    %69 = vector.shape_cast %68 : vector<1x2x8xf32> to vector<2x8xf32>
    %70 = vector.shape_cast %66 : vector<2x8xf32> to vector<1x2x8xf32>
    tpu.vector_store %arg10[%67, %c0_41, %c0_42], %70 {strides = array<i32>} : memref<6x2x8xf32, #tpu.memory_space<vmem>>, vector<1x2x8xf32>,
    %c6_i32 = arith.constant 6 : i32
    %c0_43 = arith.constant 0 : index
    %c0_44 = arith.constant 0 : index
    %71 = vector.load %arg9[%c0_43, %c0_44] : memref<2x8xf32, #tpu.memory_space<vmem>>, vector<2x8xf32>
    tpu.vector_store %arg9[%c0_43, %c0_44], %66 {strides = array<i32>} : memref<2x8xf32, #tpu.memory_space<vmem>>, vector<2x8xf32>,
    %c0_45 = arith.constant 0 : index
    %c0_46 = arith.constant 0 : index
    %c0_47 = arith.constant 0 : index
    %72 = vector.load %arg10[%c0_45, %c0_46, %c0_47] : memref<6x2x8xf32, #tpu.memory_space<vmem>>, vector<6x2x8xf32>
    %73 = vector.shape_cast %72 : vector<6x2x8xf32> to vector<12x8xf32>
    %c0_48 = arith.constant 0 : index
    %c0_49 = arith.constant 0 : index
    %74 = vector.load %arg6[%c0_48, %c0_49] : memref<8x5xf32, #tpu.memory_space<vmem>>, vector<8x5xf32>
    %cst_50 = arith.constant dense<0.000000e+00> : vector<12x5xf32>
    %75 = tpu.matmul %73, %74, %cst_50 {dimension_numbers = #tpu.dot_dimension_numbers<[1], [0], [0], [1], [0, 0, 1, 1], [], []>} : vector<12x8xf32>, vector<8x5xf32>, vector<12x5xf32> -> vector<12x5xf32>
    %c0_51 = arith.constant 0 : index
    %c0_52 = arith.constant 0 : index
    %76 = vector.load %arg7[%c0_51, %c0_52] : memref<1x5xf32, #tpu.memory_space<vmem>>, vector<1x5xf32>
    %77 = vector.broadcast %76 : vector<1x5xf32> to vector<12x5xf32>
    %78 = arith.addf %75, %77 : vector<12x5xf32>
    %79 = vector.shape_cast %78 : vector<12x5xf32> to vector<6x2x5xf32>
    %c0_53 = arith.constant 0 : index
    %c0_54 = arith.constant 0 : index
    %c0_55 = arith.constant 0 : index
    %80 = vector.load %arg8[%c0_53, %c0_54, %c0_55] : memref<6x2x5xf32, #tpu.memory_space<vmem>>, vector<6x2x5xf32>
    tpu.vector_store %arg8[%c0_53, %c0_54, %c0_55], %79 {strides = array<i32>} : memref<6x2x5xf32, #tpu.memory_space<vmem>>, vector<6x2x5xf32>,
    return
  }
  func.func @transform_0(%arg0: i32) -> (i32, i32, i32) {
    %c0_i32 = arith.constant 0 : i32
    %c0_i32_0 = arith.constant 0 : i32
    %c0_i32_1 = arith.constant 0 : i32
    %c0_i32_2 = arith.constant 0 : i32
    return %c0_i32, %c0_i32_0, %c0_i32_1 : i32, i32, i32
  }
  func.func @transform_1(%arg0: i32) -> (i32, i32) {
    %c0_i32 = arith.constant 0 : i32
    %c0_i32_0 = arith.constant 0 : i32
    %c0_i32_1 = arith.constant 0 : i32
    return %c0_i32, %c0_i32_0 : i32, i32
  }
  func.func @transform_2(%arg0: i32) -> (i32, i32) {
    %c0_i32 = arith.constant 0 : i32
    %c0_i32_0 = arith.constant 0 : i32
    %c0_i32_1 = arith.constant 0 : i32
    return %c0_i32, %c0_i32_0 : i32, i32
  }
  func.func @transform_3(%arg0: i32) -> (i32, i32) {
    %c0_i32 = arith.constant 0 : i32
    %c0_i32_0 = arith.constant 0 : i32
    %c0_i32_1 = arith.constant 0 : i32
    return %c0_i32, %c0_i32_0 : i32, i32
  }
  func.func @transform_4(%arg0: i32) -> (i32, i32) {
    %c0_i32 = arith.constant 0 : i32
    %c0_i32_0 = arith.constant 0 : i32
    %c0_i32_1 = arith.constant 0 : i32
    return %c0_i32, %c0_i32_0 : i32, i32
  }
  func.func @transform_5(%arg0: i32) -> (i32, i32) {
    %c0_i32 = arith.constant 0 : i32
    %c0_i32_0 = arith.constant 0 : i32
    %c0_i32_1 = arith.constant 0 : i32
    return %c0_i32, %c0_i32_0 : i32, i32
  }
  func.func @transform_6(%arg0: i32) -> (i32, i32) {
    %c0_i32 = arith.constant 0 : i32
    %c0_i32_0 = arith.constant 0 : i32
    %c0_i32_1 = arith.constant 0 : i32
    return %c0_i32, %c0_i32_0 : i32, i32
  }
  func.func @transform_7(%arg0: i32) -> (i32, i32, i32) {
    %c0_i32 = arith.constant 0 : i32
    %c0_i32_0 = arith.constant 0 : i32
    %c0_i32_1 = arith.constant 0 : i32
    %c0_i32_2 = arith.constant 0 : i32
    return %c0_i32, %c0_i32_0, %c0_i32_1 : i32, i32, i32
  }
  func.func @transform_8(%arg0: i32) -> (i32, i32) {
    %c0_i32 = arith.constant 0 : i32
    %c0_i32_0 = arith.constant 0 : i32
    %c0_i32_1 = arith.constant 0 : i32
    return %c0_i32, %c0_i32_0 : i32, i32
  }
}

</mosaic_0001>

<llo_original>
// kernel: tpu_custom_call.1
$region0: #{tpu_custom_call.1}
  #allocation0 [shape = 'u32[]', space=smem, size = 0x4, offset = 0x4, fixed_abs, tag = 'smem constant byte address 0x4 - core index']
  #allocation1 [shape = 'u32[72,128]{1,0:T(1,128)}', space=vmem, size = 0x9000, scoped, tag = 'internal scratch']
  #allocation2 [shape = 'f32[6,2,8]{2,1,0:T(2,128)}', space=vmem, size = 0x1800, scoped, tag = 'scratch operand']
  %s0 = inlined_call_operand.vmem [shape: f32[6,2,5], index: 0, kind: input, shape index: {}]
  %s1 = inlined_call_operand.hbm [shape: f32[2,8], index: 1, kind: input, shape index: {}]
  %s2 = inlined_call_operand.vmem [shape: f32[5,8], index: 2, kind: input, shape index: {}]
  %s3 = inlined_call_operand.vmem [shape: f32[8,8], index: 3, kind: input, shape index: {}]
  %s4 = inlined_call_operand.vmem [shape: f32[1,8], index: 4, kind: input, shape index: {}]
  %s5 = inlined_call_operand.vmem [shape: f32[8,5], index: 5, kind: input, shape index: {}]
  %s6 = inlined_call_operand.vmem [shape: f32[1,5], index: 6, kind: input, shape index: {}]
  %s7 = inlined_call_operand.vmem [shape: f32[6,2,5], index: 7, kind: output, shape index: {0}]
  %s8 = inlined_call_operand.hbm [shape: f32[2,8], index: 8, kind: output, shape index: {1}]
  %9 = xla_tuple %s7, %s8
  %s10 = sld [smem:[#allocation0]]
  $region50: #{tpu_custom_call.1} parent=0
    _
  %s12 = ssub.s32 1, %s10
  %s13 = scalar_select 0, %s12, %s10
  $region1: #{tpu_custom_call.1} parent=0
    #allocation3 [shape = 'u8[1024]{0}', space=vmem, size = 0x400, scoped, tag = 'input window, operand 1, single buffered']
    #allocation4 [shape = 's32[1]{0}', space=sflag, size = 0x4, scoped, tag = 'scoped memory for tpu_custom_call.1']
    #allocation5 [shape = 's32[1]{0}', space=sflag, size = 0x4, scoped, tag = 'scoped memory for tpu_custom_call.1']
    #allocation6 [shape = 'u8[1024]{0}', space=vmem, size = 0x400, scoped, tag = 'output window, operand 1, single buffered']
    %14 = vsyncpa [#allocation4], 0
    %15 = vsyncpa [#allocation5], 0
    // Predicated region
    $region2: #{tpu_custom_call.1} parent=1 // pred_check
      _
    $region3: #{tpu_custom_call.1} parent=1 // pred_check_branch
      %17 = sbr.rel (0) target = $region5
    $region4: #{tpu_custom_call.1} parent=1 // pred_region
      _
    $region5: #{tpu_custom_call.1} parent=1 // pred_fallthru
      _
    // Predicated region
    $region6: #{tpu_custom_call.1} parent=1 // pred_check
      _
    $region7: #{tpu_custom_call.1} parent=1 // pred_check_branch
      %19 = sbr.rel (0) target = $region9
    $region8: #{tpu_custom_call.1} parent=1 // pred_region
      %21 = vsyncadd [#allocation4], 0
      %s23 = sshll.u32 %s1, 4
      %s24 = int_to_ptr.hbm [resolvable:$true] %s23
      %s25 = sshll.u32 [#allocation3], 4
      %s26 = int_to_ptr.vmem [resolvable:$true] %s25
      %28 = dma.hbm_to_vmem [thread:$0]  %s24, 32, %s26, [#allocation4]
    $region9: #{tpu_custom_call.1} parent=1 // pred_fallthru
      _
    // Predicated region
    $region10: #{tpu_custom_call.1} parent=1 // pred_check
      _
    $region11: #{tpu_custom_call.1} parent=1 // pred_check_branch
      %30 = sbr.rel (0) target = $region13
    $region12: #{tpu_custom_call.1} parent=1 // pred_region
      _
    $region13: #{tpu_custom_call.1} parent=1 // pred_fallthru
      _
    // Predicated region
    $region14: #{tpu_custom_call.1} parent=1 // pred_check
      _
    $region15: #{tpu_custom_call.1} parent=1 // pred_check_branch
      %32 = sbr.rel (0) target = $region17
    $region16: #{tpu_custom_call.1} parent=1 // pred_region
      _
    $region17: #{tpu_custom_call.1} parent=1 // pred_fallthru
      _
    // Predicated region
    $region18: #{tpu_custom_call.1} parent=1 // pred_check
      _
    $region19: #{tpu_custom_call.1} parent=1 // pred_check_branch
      %34 = sbr.rel (0) target = $region21
    $region20: #{tpu_custom_call.1} parent=1 // pred_region
      _
    $region21: #{tpu_custom_call.1} parent=1 // pred_fallthru
      _
    // Predicated region
    $region22: #{tpu_custom_call.1} parent=1 // pred_check
      _
    $region23: #{tpu_custom_call.1} parent=1 // pred_check_branch
      %36 = sbr.rel (0) target = $region25
    $region24: #{tpu_custom_call.1} parent=1 // pred_region
      _
    $region25: #{tpu_custom_call.1} parent=1 // pred_fallthru
      _
    // Predicated region
    $region26: #{tpu_custom_call.1} parent=1 // pred_check
      _
    $region27: #{tpu_custom_call.1} parent=1 // pred_check_branch
      %38 = sbr.rel (0) target = $region29
    $region28: #{tpu_custom_call.1} parent=1 // pred_region
      _
    $region29: #{tpu_custom_call.1} parent=1 // pred_fallthru
      _
    // Predicated region
    $region30: #{tpu_custom_call.1} parent=1 // pred_check
      _
    $region31: #{tpu_custom_call.1} parent=1 // pred_check_branch
      %40 = sbr.rel (0) target = $region33
    $region32: #{tpu_custom_call.1} parent=1 // pred_region
      %42 = dma.done [#allocation4], 32
    $region33: #{tpu_custom_call.1} parent=1 // pred_fallthru
      _
    %v43 = vld [vmem:[%s0] sm:$0x3]
    %v44 = vld [vmem:[%s0 + $0x2] sm:$0x3]
    %v45 = vld [vmem:[%s0 + $0x4] sm:$0x3]
    %v46 = vld [vmem:[%s0 + $0x6] sm:$0x3]
    %v47 = vld [vmem:[%s0 + $0x8] sm:$0x3]
    %v48 = vld [vmem:[%s0 + $0xa] sm:$0x3]
    %v49 = vld [vmem:[%s2] sm:$0x1f]
    %v50 = vld [vmem:[%s4] sm:$0x1]
    %v52 = vperm.slane %v50, 0
    %60 = vst [vmem:[#allocation1] ss:$4 sm:$0xff] %v43
    %s61 = scalar_lea.vmem [#allocation1], 1
    %62 = vst [vmem:[%s61] ss:$4 sm:$0xff] %v44
    %s63 = scalar_lea.vmem [#allocation1], 2
    %64 = vst [vmem:[%s63] ss:$4 sm:$0xff] %v45
    %s65 = scalar_lea.vmem [#allocation1], 3
    %66 = vst [vmem:[%s65] ss:$4 sm:$0xff] %v46
    %s67 = scalar_lea.vmem [#allocation1], 32
    %68 = vst [vmem:[%s67] ss:$4 sm:$0xff] %v47
    %s69 = scalar_lea.vmem [#allocation1], 33
    %70 = vst [vmem:[%s69] ss:$4 sm:$0xff] %v48
    %v71 = vld.sshfl [vmem:[#allocation1] sm:$0xff pattern:$0x73625140]
    %v72 = vld.sshfl [vmem:[#allocation1 + $0x20] sm:$0xff pattern:$0x73625140]
    %vm73 = vcmask 39936
    %v74 = vsel %vm73, %v71, 0
    %v76 = vsel %vm73, %v72, 0
    %vm78 = vcmask 1044480
    %v80 = vsel %vm78, %v49, 0
    %82 = vmatpush.msra.mxu0 0.0
    %83 = vmatpush.msra.mxu0 0.0
    %84 = vmatpush.msra.mxu0 0.0
    %85 = vmatpush.msra.mxu0 0.0
    %86 = vmatpush.msra.mxu0 0.0
    %87 = vmatpush.msra.mxu0 0.0
    %88 = vmatpush.msra.mxu0 0.0
    %89 = vmatpush.msra.mxu0 0.0
    %90 = vmatpush.msra.mxu0 0.0
    %91 = vmatpush.msra.mxu0 0.0
    %92 = vmatpush.msra.mxu0 0.0
    %93 = vmatpush.msra.mxu0 0.0
    %94 = vmatpush.msra.mxu0 0.0
    %95 = vmatpush.msra.mxu0 0.0
    %96 = vmatpush.msra.mxu0 0.0
    %97 = vmatpush.msra.mxu0 %v80
    %98 = vmatmul.f32.gmra.mxu0 %v74
    %v99 = vpop.f32.mrf.mxu0
    %v100 = vadd.f32 %v52, %v99
    %101 = vmatmul.f32.gmra.mxu0 %v76
    %v102 = vpop.f32.mrf.mxu0
    %v103 = vadd.f32 %v52, %v102
    %104 = vdwg.mxu0
    %v107 = vrot.slane %v100, 2
    %v108 = vrot.slane %v100, 4
    %v109 = vrot.slane %v100, 6
    %v110 = vrot.slane %v103, 2
    %vm115 = vcmask 58368
    %116 = vst.msk [vmem:[#allocation2] sm:$0x3] %vm115, %v100
    %117 = vst.msk [vmem:[#allocation2 + $0x2] sm:$0x3] %vm115, %v107
    %118 = vst.msk [vmem:[#allocation2 + $0x4] sm:$0x3] %vm115, %v108
    %119 = vst.msk [vmem:[#allocation2 + $0x6] sm:$0x3] %vm115, %v109
    %120 = vst.msk [vmem:[#allocation2 + $0x8] sm:$0x3] %vm115, %v103
    %121 = vst.msk [vmem:[#allocation2 + $0xa] sm:$0x3] %vm115, %v110
    %v122 = vld [vmem:[%s3] sm:$0xff]
    %v123 = vld [vmem:[#allocation3] sm:$0x3]
    %v124 = vld [vmem:[#allocation2] sm:$0x3]
    %vm125 = vcmask 64512
    %v127 = vsel %vm125, %v123, 0
    %129 = vmatpush.msra.mxu0 0.0
    %130 = vmatpush.msra.mxu0 0.0
    %131 = vmatpush.msra.mxu0 0.0
    %132 = vmatpush.msra.mxu0 0.0
    %133 = vmatpush.msra.mxu0 0.0
    %134 = vmatpush.msra.mxu0 0.0
    %135 = vmatpush.msra.mxu0 0.0
    %136 = vmatpush.msra.mxu0 0.0
    %137 = vmatpush.msra.mxu0 0.0
    %138 = vmatpush.msra.mxu0 0.0
    %139 = vmatpush.msra.mxu0 0.0
    %140 = vmatpush.msra.mxu0 0.0
    %141 = vmatpush.msra.mxu0 0.0
    %142 = vmatpush.msra.mxu0 0.0
    %143 = vmatpush.msra.mxu0 0.0
    %144 = vmatpush.msra.mxu0 %v122
    %145 = vmatmul.f32.gmra.mxu0 %v127
    %v146 = vpop.f32.mrf.mxu0
    %v147 = vadd.f32 0.0, %v146
    %148 = vdwg.mxu0
    %v149 = vadd.f32 %v124, %v147
    %v150 = vtanh.pop %v149
    %151 = vst.msk [vmem:[#allocation2] sm:$0x3] %vm115, %v150
    %s152 = scalar_lea.vmem [#allocation2], 2
    %v153 = vld [vmem:[%s152] sm:$0x3]
    %v155 = vsel %vm125, %v150, 0
    %157 = vmatpush.msra.mxu0 0.0
    %158 = vmatpush.msra.mxu0 0.0
    %159 = vmatpush.msra.mxu0 0.0
    %160 = vmatpush.msra.mxu0 0.0
    %161 = vmatpush.msra.mxu0 0.0
    %162 = vmatpush.msra.mxu0 0.0
    %163 = vmatpush.msra.mxu0 0.0
    %164 = vmatpush.msra.mxu0 0.0
    %165 = vmatpush.msra.mxu0 0.0
    %166 = vmatpush.msra.mxu0 0.0
    %167 = vmatpush.msra.mxu0 0.0
    %168 = vmatpush.msra.mxu0 0.0
    %169 = vmatpush.msra.mxu0 0.0
    %170 = vmatpush.msra.mxu0 0.0
    %171 = vmatpush.msra.mxu0 0.0
    %172 = vmatpush.msra.mxu0 %v122
    %173 = vmatmul.f32.gmra.mxu0 %v155
    %v174 = vpop.f32.mrf.mxu0
    %v175 = vadd.f32 0.0, %v174
    %176 = vdwg.mxu0
    %v177 = vadd.f32 %v153, %v175
    %v178 = vtanh.pop %v177
    %179 = vst.msk [vmem:[%s152] sm:$0x3] %vm115, %v178
    %s180 = scalar_lea.vmem [#allocation2], 4
    %v181 = vld [vmem:[%s180] sm:$0x3]
    %v183 = vsel %vm125, %v178, 0
    %185 = vmatpush.msra.mxu0 0.0
    %186 = vmatpush.msra.mxu0 0.0
    %187 = vmatpush.msra.mxu0 0.0
    %188 = vmatpush.msra.mxu0 0.0
    %189 = vmatpush.msra.mxu0 0.0
    %190 = vmatpush.msra.mxu0 0.0
    %191 = vmatpush.msra.mxu0 0.0
    %192 = vmatpush.msra.mxu0 0.0
    %193 = vmatpush.msra.mxu0 0.0
    %194 = vmatpush.msra.mxu0 0.0
    %195 = vmatpush.msra.mxu0 0.0
    %196 = vmatpush.msra.mxu0 0.0
    %197 = vmatpush.msra.mxu0 0.0
    %198 = vmatpush.msra.mxu0 0.0
    %199 = vmatpush.msra.mxu0 0.0
    %200 = vmatpush.msra.mxu0 %v122
    %201 = vmatmul.f32.gmra.mxu0 %v183
    %v202 = vpop.f32.mrf.mxu0
    %v203 = vadd.f32 0.0, %v202
    %204 = vdwg.mxu0
    %v205 = vadd.f32 %v181, %v203
    %v206 = vtanh.pop %v205
    %207 = vst.msk [vmem:[%s180] sm:$0x3] %vm115, %v206
    %s208 = scalar_lea.vmem [#allocation2], 6
    %v209 = vld [vmem:[%s208] sm:$0x3]
    %v211 = vsel %vm125, %v206, 0
    %213 = vmatpush.msra.mxu0 0.0
    %214 = vmatpush.msra.mxu0 0.0
    %215 = vmatpush.msra.mxu0 0.0
    %216 = vmatpush.msra.mxu0 0.0
    %217 = vmatpush.msra.mxu0 0.0
    %218 = vmatpush.msra.mxu0 0.0
    %219 = vmatpush.msra.mxu0 0.0
    %220 = vmatpush.msra.mxu0 0.0
    %221 = vmatpush.msra.mxu0 0.0
    %222 = vmatpush.msra.mxu0 0.0
    %223 = vmatpush.msra.mxu0 0.0
    %224 = vmatpush.msra.mxu0 0.0
    %225 = vmatpush.msra.mxu0 0.0
    %226 = vmatpush.msra.mxu0 0.0
    %227 = vmatpush.msra.mxu0 0.0
    %228 = vmatpush.msra.mxu0 %v122
    %229 = vmatmul.f32.gmra.mxu0 %v211
    %v230 = vpop.f32.mrf.mxu0
    %v231 = vadd.f32 0.0, %v230
    %232 = vdwg.mxu0
    %v233 = vadd.f32 %v209, %v231
    %v234 = vtanh.pop %v233
    %235 = vst.msk [vmem:[%s208] sm:$0x3] %vm115, %v234
    %s236 = scalar_lea.vmem [#allocation2], 8
    %v237 = vld [vmem:[%s236] sm:$0x3]
    %v239 = vsel %vm125, %v234, 0
    %241 = vmatpush.msra.mxu0 0.0
    %242 = vmatpush.msra.mxu0 0.0
    %243 = vmatpush.msra.mxu0 0.0
    %244 = vmatpush.msra.mxu0 0.0
    %245 = vmatpush.msra.mxu0 0.0
    %246 = vmatpush.msra.mxu0 0.0
    %247 = vmatpush.msra.mxu0 0.0
    %248 = vmatpush.msra.mxu0 0.0
    %249 = vmatpush.msra.mxu0 0.0
    %250 = vmatpush.msra.mxu0 0.0
    %251 = vmatpush.msra.mxu0 0.0
    %252 = vmatpush.msra.mxu0 0.0
    %253 = vmatpush.msra.mxu0 0.0
    %254 = vmatpush.msra.mxu0 0.0
    %255 = vmatpush.msra.mxu0 0.0
    %256 = vmatpush.msra.mxu0 %v122
    %257 = vmatmul.f32.gmra.mxu0 %v239
    %v258 = vpop.f32.mrf.mxu0
    %v259 = vadd.f32 0.0, %v258
    %260 = vdwg.mxu0
    %v261 = vadd.f32 %v237, %v259
    %v262 = vtanh.pop %v261
    %263 = vst.msk [vmem:[%s236] sm:$0x3] %vm115, %v262
    %s264 = scalar_lea.vmem [#allocation2], 10
    %v265 = vld [vmem:[%s264] sm:$0x3]
    %v267 = vsel %vm125, %v262, 0
    %269 = vmatpush.msra.mxu0 0.0
    %270 = vmatpush.msra.mxu0 0.0
    %271 = vmatpush.msra.mxu0 0.0
    %272 = vmatpush.msra.mxu0 0.0
    %273 = vmatpush.msra.mxu0 0.0
    %274 = vmatpush.msra.mxu0 0.0
    %275 = vmatpush.msra.mxu0 0.0
    %276 = vmatpush.msra.mxu0 0.0
    %277 = vmatpush.msra.mxu0 0.0
    %278 = vmatpush.msra.mxu0 0.0
    %279 = vmatpush.msra.mxu0 0.0
    %280 = vmatpush.msra.mxu0 0.0
    %281 = vmatpush.msra.mxu0 0.0
    %282 = vmatpush.msra.mxu0 0.0
    %283 = vmatpush.msra.mxu0 0.0
    %284 = vmatpush.msra.mxu0 %v122
    %285 = vmatmul.f32.gmra.mxu0 %v267
    %v286 = vpop.f32.mrf.mxu0
    %v287 = vadd.f32 0.0, %v286
    %288 = vdwg.mxu0
    %v289 = vadd.f32 %v265, %v287
    %v290 = vtanh.pop %v289
    %291 = vst.msk [vmem:[%s264] sm:$0x3] %vm115, %v290
    %292 = vst.msk [vmem:[#allocation6] sm:$0x3] %vm115, %v290
    %v293 = vld [vmem:[#allocation2] sm:$0x3]
    %v294 = vld [vmem:[#allocation2 + $0x2] sm:$0x3]
    %v295 = vld [vmem:[#allocation2 + $0x4] sm:$0x3]
    %v296 = vld [vmem:[#allocation2 + $0x6] sm:$0x3]
    %v297 = vld [vmem:[#allocation2 + $0x8] sm:$0x3]
    %v298 = vld [vmem:[#allocation2 + $0xa] sm:$0x3]
    %v299 = vld [vmem:[%s5] sm:$0xff]
    %v300 = vld [vmem:[%s6] sm:$0x1]
    %v302 = vperm.slane %v300, 0
    %310 = vst [vmem:[#allocation1] ss:$4 sm:$0xff] %v293
    %s311 = scalar_lea.vmem [#allocation1], 1
    %312 = vst [vmem:[%s311] ss:$4 sm:$0xff] %v294
    %s313 = scalar_lea.vmem [#allocation1], 2
    %314 = vst [vmem:[%s313] ss:$4 sm:$0xff] %v295
    %s315 = scalar_lea.vmem [#allocation1], 3
    %316 = vst [vmem:[%s315] ss:$4 sm:$0xff] %v296
    %s317 = scalar_lea.vmem [#allocation1], 32
    %318 = vst [vmem:[%s317] ss:$4 sm:$0xff] %v297
    %s319 = scalar_lea.vmem [#allocation1], 33
    %320 = vst [vmem:[%s319] ss:$4 sm:$0xff] %v298
    %v321 = vld.sshfl [vmem:[#allocation1] sm:$0xff pattern:$0x73625140]
    %v322 = vld.sshfl [vmem:[#allocation1 + $0x20] sm:$0xff pattern:$0x73625140]
    %v323 = vsel %vm125, %v321, 0
    %v325 = vsel %vm125, %v322, 0
    %327 = vmatpush.msra.mxu0 0.0
    %328 = vmatpush.msra.mxu0 0.0
    %329 = vmatpush.msra.mxu0 0.0
    %330 = vmatpush.msra.mxu0 0.0
    %331 = vmatpush.msra.mxu0 0.0
    %332 = vmatpush.msra.mxu0 0.0
    %333 = vmatpush.msra.mxu0 0.0
    %334 = vmatpush.msra.mxu0 0.0
    %335 = vmatpush.msra.mxu0 0.0
    %336 = vmatpush.msra.mxu0 0.0
    %337 = vmatpush.msra.mxu0 0.0
    %338 = vmatpush.msra.mxu0 0.0
    %339 = vmatpush.msra.mxu0 0.0
    %340 = vmatpush.msra.mxu0 0.0
    %341 = vmatpush.msra.mxu0 0.0
    %342 = vmatpush.msra.mxu0 %v299
    %343 = vmatmul.f32.gmra.mxu0 %v323
    %v344 = vpop.f32.mrf.mxu0
    %v345 = vadd.f32 %v302, %v344
    %346 = vmatmul.f32.gmra.mxu0 %v325
    %v347 = vpop.f32.mrf.mxu0
    %v348 = vadd.f32 %v302, %v347
    %349 = vdwg.mxu0
    %v352 = vrot.slane %v345, 2
    %v353 = vrot.slane %v345, 4
    %v354 = vrot.slane %v345, 6
    %v355 = vrot.slane %v348, 2
    %vm360 = vcmask 33792
    %361 = vst.msk [vmem:[%s7] sm:$0x3] %vm360, %v345
    %362 = vst.msk [vmem:[%s7 + $0x2] sm:$0x3] %vm360, %v352
    %363 = vst.msk [vmem:[%s7 + $0x4] sm:$0x3] %vm360, %v353
    %364 = vst.msk [vmem:[%s7 + $0x6] sm:$0x3] %vm360, %v354
    %365 = vst.msk [vmem:[%s7 + $0x8] sm:$0x3] %vm360, %v348
    %366 = vst.msk [vmem:[%s7 + $0xa] sm:$0x3] %vm360, %v355
    // Predicated region
    $region34: #{tpu_custom_call.1} parent=1 // pred_check
      _
    $region35: #{tpu_custom_call.1} parent=1 // pred_check_branch
      %368 = sbr.rel (0) target = $region37
    $region36: #{tpu_custom_call.1} parent=1 // pred_region
      _
    $region37: #{tpu_custom_call.1} parent=1 // pred_fallthru
      _
    // Predicated region
    $region38: #{tpu_custom_call.1} parent=1 // pred_check
      _
    $region39: #{tpu_custom_call.1} parent=1 // pred_check_branch
      %370 = sbr.rel (0) target = $region41
    $region40: #{tpu_custom_call.1} parent=1 // pred_region
      %372 = vsyncadd [#allocation5], 0
      %s374 = sshll.u32 [#allocation6], 4
      %s375 = int_to_ptr.vmem [resolvable:$true] %s374
      %s376 = sshll.u32 %s8, 4
      %s377 = int_to_ptr.hbm [resolvable:$true] %s376
      %379 = dma.vmem_to_hbm [thread:$0]  %s375, 32, %s377, [#allocation5]
    $region41: #{tpu_custom_call.1} parent=1 // pred_fallthru
      _
    // Predicated region
    $region42: #{tpu_custom_call.1} parent=1 // pred_check
      _
    $region43: #{tpu_custom_call.1} parent=1 // pred_check_branch
      %381 = sbr.rel (0) target = $region45
    $region44: #{tpu_custom_call.1} parent=1 // pred_region
      _
    $region45: #{tpu_custom_call.1} parent=1 // pred_fallthru
      _
    // Predicated region
    $region46: #{tpu_custom_call.1} parent=1 // pred_check
      _
    $region47: #{tpu_custom_call.1} parent=1 // pred_check_branch
      %383 = sbr.rel (0) target = $region49
    $region48: #{tpu_custom_call.1} parent=1 // pred_region
      %385 = dma.done [#allocation5], 32
    $region49: #{tpu_custom_call.1} parent=1 // pred_fallthru
      _
    %386 = vsyncpa [#allocation4], 1
    %387 = vsyncpa [#allocation5], 1

</llo_original>
